<compile_context>
chip_gen: v7x
topology: tpu7x:2x2x1
jax: 0.10.0
libtpu: 0.0.40
codegen_flags: <defaults>
</compile_context>

<pallas_src>
import functools

import jax
import jax.numpy as jnp
from jax.experimental import pallas as pl
from jax.experimental.pallas import tpu as pltpu

LANES = 128
SUBLANES = 8
MAX_TILE_R = 2048   # (2048,128) f32 block = 1 MiB; 2 inputs x 2 buffers = 4 MiB VMEM
NCORES = 2          # leading 'parallel' axis -> split across v7x's 2 TCs; no-op on v5e/v6e


def _loss_kernel(o_ref, t_ref, out_ref, *, tile_r, steps_per_core, rows_valid,
                 needs_mask):
    """Accumulate sum of per-element (|o - t| + xlogy(t, t)) into an (8,128) block."""
    c = pl.program_id(0)
    i = pl.program_id(1)

    @pl.when(i == 0)
    def _init():
        out_ref[...] = jnp.zeros_like(out_ref)

    # Keep HBM traffic in the native dtype; widen to f32 only in vregs.
    o = o_ref[...].astype(jnp.float32)
    t = t_ref[...].astype(jnp.float32)

    # torch.xlogy(t, t): 0 where t == 0 (select discards the 0 * -inf NaN),
    # NaN where t < 0 (log of a negative) — both matched here.
    xlogy_tt = jnp.where(t == 0.0, 0.0, t * jnp.log(t))
    term = jnp.abs(o - t) + xlogy_tt

    if needs_mask:
        # Zero rows past the real array: the partial edge block and the fully
        # out-of-range (clamped) blocks of the second core contribute nothing.
        start = (c * steps_per_core + i) * tile_r
        row_ids = start + jax.lax.broadcasted_iota(jnp.int32, (tile_r, 1), 0)
        term = jnp.where(row_ids < rows_valid, term, 0.0)

    # Tree-style partial sums: pure VPU adds into one (8,128) vreg tile; the
    # full cross-lane reduction happens exactly once, outside the kernel.
    out_ref[...] += jnp.sum(term.reshape(tile_r // SUBLANES, SUBLANES, LANES), axis=0)


@jax.jit
def loss_custom(output, target):
    assert output.shape == target.shape
    n_elems = output.size

    o_flat = output.reshape(-1)
    t_flat = target.reshape(-1)

    # Pad (zeros) only if needed, and only to the next multiple of one (8,128)
    # tile; zero padding contributes exactly 0 to every term
    # (|0-0| = 0, xlogy(0,0) = 0, 0*0 = 0).
    chunk = SUBLANES * LANES
    padded = pl.cdiv(n_elems, chunk) * chunk
    if padded != n_elems:
        o_flat = jnp.pad(o_flat, (0, padded - n_elems))
        t_flat = jnp.pad(t_flat, (0, padded - n_elems))

    rows = padded // LANES                      # multiple of 8
    o2d = o_flat.reshape(rows, LANES)
    t2d = t_flat.reshape(rows, LANES)

    tile_r = min(MAX_TILE_R, rows)              # full-extent block for small inputs
    num_blocks = pl.cdiv(rows, tile_r)
    steps_per_core = pl.cdiv(num_blocks, NCORES)
    needs_mask = (NCORES * steps_per_core * tile_r) != rows

    def in_map(c, i):
        # Clamp so the DMA never starts past the array; logically out-of-range
        # blocks are fully zeroed by the in-kernel row mask.
        return (jnp.minimum(c * steps_per_core + i, num_blocks - 1), 0)

    kernel = functools.partial(
        _loss_kernel,
        tile_r=tile_r,
        steps_per_core=steps_per_core,
        rows_valid=rows,
        needs_mask=needs_mask,
    )

    partials = pl.pallas_call(
        kernel,
        out_shape=jax.ShapeDtypeStruct((NCORES, SUBLANES, LANES), jnp.float32),
        grid_spec=pltpu.PrefetchScalarGridSpec(
            num_scalar_prefetch=0,
            grid=(NCORES, steps_per_core),
            in_specs=[
                pl.BlockSpec((tile_r, LANES), in_map),
                pl.BlockSpec((tile_r, LANES), in_map),
            ],
            out_specs=pl.BlockSpec((None, SUBLANES, LANES), lambda c, i: (c, 0, 0)),
        ),
        compiler_params=pltpu.CompilerParams(
            dimension_semantics=("parallel", "arbitrary"),
        ),
    )(o2d, t2d)

    # sum(pointwise) / N == mean(l1) + mean(kl) + mean(wasserstein)
    return jnp.sum(partials) / jnp.float32(n_elems)


def _reference(output, target):
    o = output.astype(jnp.float32)
    t = target.astype(jnp.float32)
    l1 = jnp.mean(jnp.abs(o - t))
    kl = jnp.mean(jnp.where(t == 0.0, 0.0, t * jnp.log(t)) - t * o)
    w = jnp.mean(o * t)
    return w + l1 + kl


if __name__ == "__main__":
    key = jax.random.PRNGKey(0)
    k1, k2 = jax.random.split(key)

    # Typical KLDiv usage: output = log-probs, target = probs. Shape (2,4,16,16).
    logits_o = jax.random.normal(k1, (2, 4, 16, 16), dtype=jnp.float32)
    logits_t = jax.random.normal(k2, (2, 4, 16, 16), dtype=jnp.float32)
    output = jax.nn.log_softmax(logits_o, axis=-1)
    target = jax.nn.softmax(logits_t, axis=-1)

    loss = loss_custom(output, target)
    jax.block_until_ready(loss)

    ref = _reference(output, target)
    assert jnp.allclose(loss, ref, rtol=1e-5, atol=1e-6), (loss, ref)

    print("KERNEL_OK")
</pallas_src>

<mosaic_0001>
module attributes {stable_mosaic.version = 11 : i64} {
  func.func @_loss_kernel(%arg0: i32, %arg1: i32, %arg2: memref<16x128xf32, #tpu.memory_space<vmem>>, %arg3: memref<16x128xf32, #tpu.memory_space<vmem>>, %arg4: memref<1x8x128xf32, #tpu.memory_space<vmem>>) attributes {dimension_semantics = [#tpu.dimension_semantics<parallel>, #tpu.dimension_semantics<arbitrary>], iteration_bounds = array<i64: 2, 1>, scalar_prefetch = 0 : i64, scratch_operands = 0 : i64, tpu.core_type = #tpu.core_type<tc>, window_params = [{transform_indices = @transform_0, window_bounds = array<i64: 16, 128>}, {transform_indices = @transform_1, window_bounds = array<i64: 16, 128>}, {transform_indices = @transform_2, window_bounds = array<i64: 1, 8, 128>}]} {
    %c0_i32 = arith.constant 0 : i32
    %0 = arith.cmpi eq, %arg1, %c0_i32 : i32
    %1 = arith.extui %0 : i1 to i32
    %c0_i32_0 = arith.constant 0 : i32
    %2 = arith.cmpi ne, %1, %c0_i32_0 : i32
    scf.if %2 {
      %cst_14 = arith.constant 0.000000e+00 : f32
      %34 = vector.broadcast %cst_14 : f32 to vector<8x128xf32>
      %c0_15 = arith.constant 0 : index
      %c0_16 = arith.constant 0 : index
      %c0_17 = arith.constant 0 : index
      %35 = vector.load %arg4[%c0_15, %c0_16, %c0_17] : memref<1x8x128xf32, #tpu.memory_space<vmem>>, vector<1x8x128xf32>
      %36 = vector.shape_cast %35 : vector<1x8x128xf32> to vector<8x128xf32>
      %37 = vector.shape_cast %34 : vector<8x128xf32> to vector<1x8x128xf32>
      tpu.vector_store %arg4[%c0_15, %c0_16, %c0_17], %37 {strides = array<i32>} : memref<1x8x128xf32, #tpu.memory_space<vmem>>, vector<1x8x128xf32>,
    } else {
    }
    %c0 = arith.constant 0 : index
    %c0_1 = arith.constant 0 : index
    %3 = vector.load %arg2[%c0, %c0_1] : memref<16x128xf32, #tpu.memory_space<vmem>>, vector<16x128xf32>
    %c0_2 = arith.constant 0 : index
    %c0_3 = arith.constant 0 : index
    %4 = vector.load %arg3[%c0_2, %c0_3] : memref<16x128xf32, #tpu.memory_space<vmem>>, vector<16x128xf32>
    %cst = arith.constant 0.000000e+00 : f32
    %5 = vector.broadcast %cst : f32 to vector<16x128xf32>
    %6 = arith.cmpf oeq, %4, %5 : vector<16x128xf32>
    %7 = math.log %4 : vector<16x128xf32>
    %8 = arith.mulf %4, %7 : vector<16x128xf32>
    %cst_4 = arith.constant 0.000000e+00 : f32
    %9 = vector.broadcast %cst_4 : f32 to vector<16x128xf32>
    %10 = arith.select %6, %9, %8 : vector<16x128xi1>, vector<16x128xf32>
    %11 = arith.subf %3, %4 : vector<16x128xf32>
    %12 = math.absf %11 : vector<16x128xf32>
    %13 = arith.addf %12, %10 : vector<16x128xf32>
    %c1_i32 = arith.constant 1 : i32
    %14 = arith.muli %arg0, %c1_i32 : i32
    %15 = arith.addi %14, %arg1 : i32
    %c16_i32 = arith.constant 16 : i32
    %16 = arith.muli %15, %c16_i32 : i32
    %17 = tpu.iota {dimensions = array<i32: 0>} : vector<16x1xi32>
    %18 = vector.broadcast %16 : i32 to vector<16x1xi32>
    %19 = arith.addi %18, %17 : vector<16x1xi32>
    %c16_i32_5 = arith.constant 16 : i32
    %20 = vector.broadcast %c16_i32_5 : i32 to vector<16x1xi32>
    %21 = arith.cmpi slt, %19, %20 : vector<16x1xi32>
    %cst_6 = arith.constant 0.000000e+00 : f32
    %22 = vector.shape_cast %21 : vector<16x1xi1> to vector<16x1xi1>
    %23 = vector.broadcast %22 : vector<16x1xi1> to vector<16x128xi1>
    %24 = vector.broadcast %cst_6 : f32 to vector<16x128xf32>
    %25 = arith.select %23, %13, %24 : vector<16x128xi1>, vector<16x128xf32>
    %c0_7 = arith.constant 0 : index
    %c0_8 = arith.constant 0 : index
    %c0_9 = arith.constant 0 : index
    %26 = vector.load %arg4[%c0_7, %c0_8, %c0_9] : memref<1x8x128xf32, #tpu.memory_space<vmem>>, vector<1x8x128xf32>
    %27 = vector.shape_cast %26 : vector<1x8x128xf32> to vector<8x128xf32>
    %28 = vector.shape_cast %25 : vector<16x128xf32> to vector<2x8x128xf32>
    %cst_10 = arith.constant dense<0.000000e+00> : vector<8x128xf32>
    %29 = vector.multi_reduction <add>, %28, %cst_10 [0] : vector<2x8x128xf32> to vector<8x128xf32>
    %30 = arith.addf %27, %29 : vector<8x128xf32>
    %c0_11 = arith.constant 0 : index
    %c0_12 = arith.constant 0 : index
    %c0_13 = arith.constant 0 : index
    %31 = vector.load %arg4[%c0_11, %c0_12, %c0_13] : memref<1x8x128xf32, #tpu.memory_space<vmem>>, vector<1x8x128xf32>
    %32 = vector.shape_cast %31 : vector<1x8x128xf32> to vector<8x128xf32>
    %33 = vector.shape_cast %30 : vector<8x128xf32> to vector<1x8x128xf32>
    tpu.vector_store %arg4[%c0_11, %c0_12, %c0_13], %33 {strides = array<i32>} : memref<1x8x128xf32, #tpu.memory_space<vmem>>, vector<1x8x128xf32>,
    return
  }
  func.func @transform_0(%arg0: i32, %arg1: i32) -> (i32, i32) {
    %c1_i32 = arith.constant 1 : i32
    %0 = arith.muli %arg0, %c1_i32 : i32
    %1 = arith.addi %0, %arg1 : i32
    %c0_i32 = arith.constant 0 : i32
    %2 = arith.minsi %1, %c0_i32 : i32
    %c0_i32_0 = arith.constant 0 : i32
    %c0_i32_1 = arith.constant 0 : i32
    return %2, %c0_i32_0 : i32, i32
  }
  func.func @transform_1(%arg0: i32, %arg1: i32) -> (i32, i32) {
    %c1_i32 = arith.constant 1 : i32
    %0 = arith.muli %arg0, %c1_i32 : i32
    %1 = arith.addi %0, %arg1 : i32
    %c0_i32 = arith.constant 0 : i32
    %2 = arith.minsi %1, %c0_i32 : i32
    %c0_i32_0 = arith.constant 0 : i32
    %c0_i32_1 = arith.constant 0 : i32
    return %2, %c0_i32_0 : i32, i32
  }
  func.func @transform_2(%arg0: i32, %arg1: i32) -> (i32, i32, i32) {
    %c0_i32 = arith.constant 0 : i32
    %c0_i32_0 = arith.constant 0 : i32
    %c0_i32_1 = arith.constant 0 : i32
    return %arg0, %c0_i32, %c0_i32_0 : i32, i32, i32
  }
}

</mosaic_0001>

<llo_original>
// kernel: loss_custom.1
$region0: #{loss_custom.1}
  #allocation0 [shape = 'u32[]', space=smem, size = 0x4, offset = 0x4, fixed_abs, tag = 'smem constant byte address 0x4 - core index']
  #allocation1 [shape = 'u32[144,128]{1,0:T(1,128)}', space=vmem, size = 0x12000, scoped, tag = 'internal scratch']
  %s0 = inlined_call_operand.vmem [shape: f32[16,128], index: 0, kind: input, shape index: {}]
  %s1 = inlined_call_operand.vmem [shape: f32[16,128], index: 1, kind: input, shape index: {}]
  %s2 = inlined_call_operand.vmem [shape: f32[2,8,128], index: 2, kind: output, shape index: {}]
  %s3 = sld [smem:[#allocation0]]
  $region45: #{loss_custom.1} parent=0
    _
  %s5 = ssub.s32 1, %s3
  %s6 = scalar_select 0, %s5, %s3
  loop: start=0, step=1, limit=4
  $region2: #{loss_custom.1} parent=0 // loop_pre_header
    _
  $region3: #{loss_custom.1} parent=0 // loop_header
    %s8 = sphi 0, %s12
    %p9 = scmp.ge.s32.totalorder %s8, 4
    %s15 = sphi 0, %s27
    %s16 = sphi 0, %s23
    %s17 = sphi 0, %s15
    %s18 = sphi 0, %s16
    %s19 = sphi 0, %s17
    %s20 = sphi 0, %s18
    %s36 = sphi 0, %s38
    %s39 = sphi 0, %s36
    %s40 = sphi 0, %s39
    %s56 = sphi 0, %s40
    %s68 = sphi 0, %s70
    %s71 = sphi 0, %s68
    %s72 = sphi 0, %s71
    %s88 = sphi 0, %s72
    %s94 = sphi 0, %s96
    %s97 = sphi 0, %s94
    %s98 = sphi 0, %s97
    %s114 = sphi 0, %s98
  $region4: #{loss_custom.1} parent=0 // loop_header_branch
    %11 = sbr.rel (%p9) target = $region8
  $region5: #{loss_custom.1} parent=0 // loop_body
    %s13 = ssub.s32 %s8, 1
    %s14 = ssub.s32 %s8, 2
    %s21 = sadd.s32 1, %s16
    %p22 = scmp.ge.s32.totalorder %s21, 1
    %s23 = scalar_select %p22, 0, %s21
    %s24 = sadd.s32 1, %s15
    %s25 = scalar_select %p22, %s24, %s15
    %p26 = scmp.ge.s32.totalorder %s25, 2
    %s27 = scalar_select %p26, 0, %s25
    %s28 = sadd.s32 %s15, %s16
    %p29 = scmp.lt.s32.totalorder %s28, 0
    %s30 = scalar_select %p29, %s28, 0
    %s31 = sadd.s32 %s27, %s23
    %p32 = scmp.lt.s32.totalorder %s31, 0
    %s33 = scalar_select %p32, %s31, 0
    %s34 = ssub.s32 %s30, %s33
    %p35 = scmp.eq.s32.totalorder %s34, 0
    %s37 = sadd.s32 %s36, 1
    %s38 = scalar_select %p35, %s36, %s37
    %p41 = pneg %p35
    %p42 = scmp.eq.s32.totalorder %s8, 1
    %p43 = por %p41, %p42
    %p44 = scmp.ne.s32.totalorder %s36, %s39
    %p45 = scmp.eq.s32.totalorder %s8, 0
    %p46 = por %p44, %p45
    %p47 = scmp.ne.s32.totalorder %s36, %s39
    %p48 = scmp.eq.s32.totalorder %s13, 1
    %p49 = por %p47, %p48
    %p50 = scmp.ne.s32.totalorder %s39, %s40
    %p51 = scmp.eq.s32.totalorder %s13, 0
    %p52 = por %p50, %p51
    %p53 = scmp.ne.s32.totalorder %s39, %s40
    %p54 = scmp.eq.s32.totalorder %s14, 1
    %p55 = por %p53, %p54
    %p57 = scmp.ne.s32.totalorder %s40, %s56
    %p58 = scmp.eq.s32.totalorder %s14, 0
    %p59 = por %p57, %p58
    %s60 = sadd.s32 %s15, %s16
    %p61 = scmp.lt.s32.totalorder %s60, 0
    %s62 = scalar_select %p61, %s60, 0
    %s63 = sadd.s32 %s27, %s23
    %p64 = scmp.lt.s32.totalorder %s63, 0
    %s65 = scalar_select %p64, %s63, 0
    %s66 = ssub.s32 %s62, %s65
    %p67 = scmp.eq.s32.totalorder %s66, 0
    %s69 = sadd.s32 %s68, 1
    %s70 = scalar_select %p67, %s68, %s69
    %p73 = pneg %p67
    %p74 = scmp.eq.s32.totalorder %s8, 1
    %p75 = por %p73, %p74
    %p76 = scmp.ne.s32.totalorder %s68, %s71
    %p77 = scmp.eq.s32.totalorder %s8, 0
    %p78 = por %p76, %p77
    %p79 = scmp.ne.s32.totalorder %s68, %s71
    %p80 = scmp.eq.s32.totalorder %s13, 1
    %p81 = por %p79, %p80
    %p82 = scmp.ne.s32.totalorder %s71, %s72
    %p83 = scmp.eq.s32.totalorder %s13, 0
    %p84 = por %p82, %p83
    %p85 = scmp.ne.s32.totalorder %s71, %s72
    %p86 = scmp.eq.s32.totalorder %s14, 1
    %p87 = por %p85, %p86
    %p89 = scmp.ne.s32.totalorder %s72, %s88
    %p90 = scmp.eq.s32.totalorder %s14, 0
    %p91 = por %p89, %p90
    %s92 = ssub.s32 %s15, %s27
    %p93 = scmp.eq.s32.totalorder %s92, 0
    %s95 = sadd.s32 %s94, 1
    %s96 = scalar_select %p93, %s94, %s95
    %p99 = pneg %p93
    %p100 = scmp.eq.s32.totalorder %s8, 1
    %p101 = por %p99, %p100
    %p102 = scmp.ne.s32.totalorder %s94, %s97
    %p103 = scmp.eq.s32.totalorder %s8, 0
    %p104 = por %p102, %p103
    %p105 = scmp.ne.s32.totalorder %s94, %s97
    %p106 = scmp.eq.s32.totalorder %s13, 1
    %p107 = por %p105, %p106
    %p108 = scmp.ne.s32.totalorder %s97, %s98
    %p109 = scmp.eq.s32.totalorder %s13, 0
    %p110 = por %p108, %p109
    %p111 = scmp.ne.s32.totalorder %s97, %s98
    %p112 = scmp.eq.s32.totalorder %s14, 1
    %p113 = por %p111, %p112
    %p115 = scmp.ne.s32.totalorder %s98, %s114
    %p116 = scmp.eq.s32.totalorder %s14, 0
    %p117 = por %p115, %p116
    %p118 = scmp.le.s32.totalorder 1, %s8
    %p119 = scmp.lt.s32.totalorder %s8, 3
    %p120 = pnand %p118, %p119
    %p121 = pneg %p120
    // Predicated region
    $region9: #{loss_custom.1} parent=5 // pred_check
      _
    $region10: #{loss_custom.1} parent=5 // pred_check_branch
      %123 = sbr.rel (%p120) target = $region12
    $region11: #{loss_custom.1} parent=5 // pred_region
      %s124 = ssub.s32 %s8, 1
    $region12: #{loss_custom.1} parent=5 // pred_fallthru
      _
    %p125 = scmp.lt.s32.totalorder %s8, 2
    // Predicated region
    $region13: #{loss_custom.1} parent=5 // pred_check
      %p126 = pneg %p125
    $region14: #{loss_custom.1} parent=5 // pred_check_branch
      %128 = sbr.rel (%p126) target = $region16
    $region15: #{loss_custom.1} parent=5 // pred_region
      // Predicated region
      $region17: #{loss_custom.1} parent=15 // pred_check
        %p129 = pneg %p46
      $region18: #{loss_custom.1} parent=15 // pred_check_branch
        %131 = sbr.rel (%p129) target = $region20
      $region19: #{loss_custom.1} parent=15 // pred_region
        %s132 = sadd.s32 %s15, %s16
        %p133 = scmp.lt.s32.totalorder %s132, 0
        %s134 = scalar_select %p133, %s132, 0
        %s135 = smul.u32 2, %s134
        %p136 = scmp.lt.s32.totalorder %s135, 1
        %s137 = scalar_select %p136, %s135, 1
        %s138 = smul.addr %s137, 8
        %s139 = scalar_lea.vmem %s0, %s138
        %s140 = sadd.s32 %s15, %s16
        %p141 = scmp.lt.s32.totalorder %s140, 0
        %s142 = scalar_select %p141, %s140, 0
        %s143 = smul.u32 2, %s142
      $region20: #{loss_custom.1} parent=15 // pred_fallthru
        _
      // Predicated region
      $region21: #{loss_custom.1} parent=15 // pred_check
        %p144 = pneg %p78
      $region22: #{loss_custom.1} parent=15 // pred_check_branch
        %146 = sbr.rel (%p144) target = $region24
      $region23: #{loss_custom.1} parent=15 // pred_region
        %s147 = sadd.s32 %s15, %s16
        %p148 = scmp.lt.s32.totalorder %s147, 0
        %s149 = scalar_select %p148, %s147, 0
        %s150 = smul.u32 2, %s149
        %p151 = scmp.lt.s32.totalorder %s150, 1
        %s152 = scalar_select %p151, %s150, 1
        %s153 = smul.addr %s152, 8
        %s154 = scalar_lea.vmem %s1, %s153
        %s155 = sadd.s32 %s15, %s16
        %p156 = scmp.lt.s32.totalorder %s155, 0
        %s157 = scalar_select %p156, %s155, 0
        %s158 = smul.u32 2, %s157
      $region24: #{loss_custom.1} parent=15 // pred_fallthru
        _
    $region16: #{loss_custom.1} parent=5 // pred_fallthru
      _
    %p159 = scmp.le.s32.totalorder 1, %s8
    %p160 = scmp.lt.s32.totalorder %s8, 3
    %p161 = pnand %p159, %p160
    %p162 = pneg %p161
    // Predicated region
    $region25: #{loss_custom.1} parent=5 // pred_check
      _
    $region26: #{loss_custom.1} parent=5 // pred_check_branch
      %164 = sbr.rel (%p161) target = $region28
    $region27: #{loss_custom.1} parent=5 // pred_region
      %s165 = ssub.s32 %s8, 1
      %s166 = sadd.s32 %s17, %s18
      %p167 = scmp.lt.s32.totalorder %s166, 0
      %s168 = scalar_select %p167, %s166, 0
      %s169 = smul.u32 2, %s168
      %p170 = scmp.lt.s32.totalorder %s169, 1
      %s171 = scalar_select %p170, %s169, 1
      %s172 = smul.addr %s171, 8
      %s173 = scalar_lea.vmem %s0, %s172
      %p174 = pneg %p52
      %p175 = pneg %p49
      %s176 = sadd.s32 %s17, %s18
      %p177 = scmp.lt.s32.totalorder %s176, 0
      %s178 = scalar_select %p177, %s176, 0
      %s179 = smul.u32 2, %s178
      %p180 = scmp.lt.s32.totalorder %s179, 1
      %s181 = scalar_select %p180, %s179, 1
      %s182 = smul.addr %s181, 8
      %s183 = scalar_lea.vmem %s1, %s182
      %p184 = pneg %p84
      %p185 = pneg %p81
      %p186 = pneg %p110
      %p187 = pneg %p107
      %p188 = scmp.lt.s32.totalorder %s17, 1
      %s189 = scalar_select %p188, %s17, 1
      %s190 = smul.addr %s189, 8
      %s191 = scalar_lea.vmem %s2, %s190
      %s192 = sadd.s32 %s17, %s18
      %p193 = scmp.lt.s32.totalorder %s192, 0
      %s194 = scalar_select %p193, %s192, 0
      %s195 = smul.u32 2, %s194
      %p196 = scmp.lt.s32.totalorder %s195, 1
      %s197 = scalar_select %p196, %s195, 1
      %s198 = smul.addr %s197, 8
      %s199 = scalar_lea.vmem %s0, %s198
      %s200 = sadd.s32 %s17, %s18
      %p201 = scmp.lt.s32.totalorder %s200, 0
      %s202 = scalar_select %p201, %s200, 0
      %s203 = smul.u32 2, %s202
      %s204 = sadd.s32 %s17, %s18
      %p205 = scmp.lt.s32.totalorder %s204, 0
      %s206 = scalar_select %p205, %s204, 0
      %s207 = smul.u32 2, %s206
      %p208 = scmp.lt.s32.totalorder %s207, 1
      %s209 = scalar_select %p208, %s207, 1
      %s210 = smul.addr %s209, 8
      %s211 = scalar_lea.vmem %s1, %s210
      %s212 = sadd.s32 %s17, %s18
      %p213 = scmp.lt.s32.totalorder %s212, 0
      %s214 = scalar_select %p213, %s212, 0
      %s215 = smul.u32 2, %s214
      %p216 = scmp.lt.s32.totalorder %s17, 1
      %s217 = scalar_select %p216, %s17, 1
      %s218 = smul.addr %s217, 8
      %s219 = scalar_lea.vmem %s2, %s218
      %p220 = scmp.eq.s32.totalorder %s18, 0
      // Predicated region
      $region29: #{loss_custom.1} parent=27 // pred_check
        %p221 = pneg %p220
      $region30: #{loss_custom.1} parent=27 // pred_check_branch
        %223 = sbr.rel (%p221) target = $region32
      $region31: #{loss_custom.1} parent=27 // pred_region
        %224 = vst [vmem:[%s219] sm:$0xff] 0.0
      $region32: #{loss_custom.1} parent=27 // pred_fallthru
        _
      %v225 = vld [vmem:[%s199] sm:$0xff]
      %v226 = vld [vmem:[%s199 + $0x8] sm:$0xff]
      %v227 = vld [vmem:[%s211] sm:$0xff]
      %v228 = vld [vmem:[%s211 + $0x8] sm:$0xff]
      %vm229 = vcmp.eq.f32.partialorder %v227, 0.0
      %vm230 = vcmp.eq.f32.partialorder %v228, 0.0
      %v231 = vlog2.pop %v227
      %v232 = vmul.f32 %v231, 0.6931472
      %v233 = vlog2.pop %v228
      %v234 = vmul.f32 %v233, 0.6931472
      %v235 = vmul.f32 %v227, %v232
      %v236 = vmul.f32 %v228, %v234
      %v237 = vsel %vm229, 0.0, %v235
      %v238 = vsel %vm230, 0.0, %v236
      %v239 = vsub.f32 %v225, %v227
      %v240 = vsub.f32 %v226, %v228
      %v241 = vand.u32 2147483647, %v239
      %v242 = vand.u32 2147483647, %v240
      %v243 = vadd.f32 %v241, %v237
      %v244 = vadd.f32 %v242, %v238
      %s245 = sadd.s32 %s17, %s18
      %s246 = smul.u32 %s245, 16
      %v247 = vlaneseq
      %v248 = vshrl.u32 %v247, 7
      %v249 = vadd.s32 %v248, 8
      %v250 = vstv %s246
      %v251 = vadd.s32 %v250, %v248
      %v252 = vadd.s32 %v250, %v249
      %vm253 = vcmp.lt.s32.totalorder %v251, 16
      %vm254 = vcmp.lt.s32.totalorder %v252, 16
      %v255 = vsel %vm253, 1, 0
      %v256 = vsel %vm254, 1, 0
      %vm257 = vcmp.eq.s32.totalorder %v255, 1
      %vm258 = vcmp.eq.s32.totalorder %v256, 1
      %v259 = vsel %vm257, %v243, 0.0
      %v260 = vsel %vm258, %v244, 0.0
      %v261 = vld [vmem:[%s219] sm:$0xff]
      %v262 = vadd.f32 %v259, %v260
      %v263 = vadd.f32 %v261, %v262
      %264 = vst [vmem:[%s219] sm:$0xff] %v263
      %p265 = scmp.lt.s32.totalorder %s17, 1
      %s266 = scalar_select %p265, %s17, 1
      %s267 = smul.addr %s266, 8
      %s268 = scalar_lea.vmem %s2, %s267
      // Predicated region
      $region33: #{loss_custom.1} parent=27 // pred_check
        %p269 = pneg %p107
      $region34: #{loss_custom.1} parent=27 // pred_check_branch
        %271 = sbr.rel (%p269) target = $region36
      $region35: #{loss_custom.1} parent=27 // pred_region
        _
      $region36: #{loss_custom.1} parent=27 // pred_fallthru
        _
    $region28: #{loss_custom.1} parent=5 // pred_fallthru
      _
    %p272 = scmp.le.s32.totalorder 2, %s8
    // Predicated region
    $region37: #{loss_custom.1} parent=5 // pred_check
      %p273 = pneg %p272
    $region38: #{loss_custom.1} parent=5 // pred_check_branch
      %275 = sbr.rel (%p273) target = $region40
    $region39: #{loss_custom.1} parent=5 // pred_region
      %s276 = ssub.s32 %s8, 2
      // Predicated region
      $region41: #{loss_custom.1} parent=39 // pred_check
        %p277 = pneg %p113
      $region42: #{loss_custom.1} parent=39 // pred_check_branch
        %279 = sbr.rel (%p277) target = $region44
      $region43: #{loss_custom.1} parent=39 // pred_region
        %p280 = scmp.lt.s32.totalorder %s19, 1
        %s281 = scalar_select %p280, %s19, 1
        %s282 = smul.addr %s281, 8
        %s283 = scalar_lea.vmem %s2, %s282
      $region44: #{loss_custom.1} parent=39 // pred_fallthru
        _
    $region40: #{loss_custom.1} parent=5 // pred_fallthru
      _
  $region6: #{loss_custom.1} parent=0 // loop_footer
    %s12 = sadd.s32 1, %s8
  $region7: #{loss_custom.1} parent=0 // loop_footer_branch
    %7 = sbr.rel target = $region3
  $region8: #{loss_custom.1} parent=0 // loop_exit
    _

</llo_original>
